<compile_context>
chip_gen: v6e
topology: v6e:2x2x1
jax: 0.10.0
libtpu: 0.0.40
codegen_flags: <defaults>
</compile_context>

<pallas_src>
import jax
import jax.numpy as jnp
from jax.experimental import pallas as pl
from jax.experimental.pallas import tpu as pltpu


def _round_up(x, m):
    return (x + m - 1) // m * m


# ---------------------------------------------------------------------------
# Kernels
# ---------------------------------------------------------------------------

def _gcn_kernel(x_ref, b_ref, bias_ref, o_ref):
    """Fused kernel, contraction not split.  grid = (m, n).

    x_ref:    (Mb, bk)    rows = flattened (n, t), lanes = (c_in, v)
    b_ref:    (bk, bn)    folded conv-weight x adjacency
    bias_ref: (1,  bn)    folded conv-bias x adjacency (f32)
    o_ref:    (Mb, bn)
    """
    acc = jnp.dot(x_ref[...], b_ref[...], preferred_element_type=jnp.float32)
    o_ref[...] = (acc + bias_ref[...]).astype(o_ref.dtype)


def _gcn_kernel_ksplit(x_ref, b_ref, bias_ref, o_ref, acc_ref):
    """Fused kernel with a reduction grid axis over the contraction (CinV).

    grid = (m, n, k); acc_ref is an f32 VMEM accumulator (Mb, bn).
    """
    @pl.when(pl.program_id(2) == 0)
    def _():
        acc_ref[...] = jnp.zeros_like(acc_ref)

    acc_ref[...] += jnp.dot(x_ref[...], b_ref[...],
                            preferred_element_type=jnp.float32)

    @pl.when(pl.program_id(2) == pl.num_programs(2) - 1)
    def _():
        o_ref[...] = (acc_ref[...] + bias_ref[...]).astype(o_ref.dtype)


# ---------------------------------------------------------------------------
# Wrapper
# ---------------------------------------------------------------------------

def graph_convolution(x, conv_w, conv_b, A, *, kernel_size,
                      compute_dtype=jnp.bfloat16,
                      out_dtype=None,
                      block_rows=512,
                      block_cols=None,
                      block_k=None,
                      x_format="NCTV",
                      out_format="NCTV",
                      vmem_budget_bytes=36 * (1 << 20)):
    """Forward pass of GraphConvolution.

    x:      (N, C_in, T, V) for x_format="NCTV" (PyTorch layout) or
            (N, T, C_in, V) for x_format="NTCV" (transpose-free fast path).
    conv_w: (K*C_out, C_in)   1x1 conv weight (squeezed from (KC, C_in, 1, 1))
    conv_b: (K*C_out,)        conv bias
    A:      (K, V, W)         adjacency stack
    Returns (N, C_out, T, W) (or (N, T, C_out, W) for out_format="NTCV").
    """
    if x_format == "NCTV":
        N, C_in, T, V = x.shape
    elif x_format == "NTCV":
        N, T, C_in, V = x.shape
    else:
        raise ValueError(f"unknown x_format {x_format!r}")

    KC = conv_w.shape[0]
    K = int(kernel_size)
    assert KC % K == 0, (KC, K)
    C_out = KC // K
    W = A.shape[-1]
    assert A.shape == (K, V, W), A.shape
    assert conv_w.shape == (KC, C_in), conv_w.shape
    assert conv_b.shape == (KC,), conv_b.shape
    out_dtype = x.dtype if out_dtype is None else out_dtype

    CinV = C_in * V
    CoutW = C_out * W
    M = N * T

    # ---- host-side operand folding (f32, once per call) ----
    w3 = conv_w.reshape(K, C_out, C_in).astype(jnp.float32)
    a32 = A.astype(jnp.float32)
    B = jnp.einsum('koi,kvw->ivow', w3, a32).reshape(CinV, CoutW)
    bias_f = jnp.einsum('ko,kvw->ow',
                        conv_b.reshape(K, C_out).astype(jnp.float32),
                        a32).reshape(1, CoutW)

    # ---- row (M = N*T) tiling ----
    Mb = max(8, _round_up(int(block_rows), 8))      # (8,128) sublane rule
    Mb = min(Mb, _round_up(M, 8))
    if M > 8 and pl.cdiv(M, Mb) < 2:
        # Keep >= 2 grid steps along the parallel M axis (v7x has 2 TCs).
        Mb = max(8, _round_up(pl.cdiv(M, 2), 8))
    M_pad = _round_up(M, Mb)

    # ---- column (CoutW) and contraction (CinV) tiling from a VMEM budget ----
    bytes_c = jnp.dtype(compute_dtype).itemsize
    bytes_o = jnp.dtype(out_dtype).itemsize
    # 256-aligned contraction fills the 2x256 MXU on v6e/v7x; 128 suffices
    # when the contraction is tiny anyway.
    k_align = 128 if CinV <= 128 else 256

    bn = _round_up(CoutW, 128) if block_cols is None \
        else _round_up(min(int(block_cols), _round_up(CoutW, 128)), 128)
    bk = _round_up(CinV, k_align) if block_k is None \
        else _round_up(min(int(block_k), _round_up(CinV, k_align)), k_align)

    def _vmem_estimate(bk_, bn_):
        # Double-buffered x / B / bias / out tiles + f32 accumulator
        # (conservative: acc counted even when the k axis ends up unsplit).
        return (2 * Mb * bk_ * bytes_c        # x tile
                + 2 * bk_ * bn_ * bytes_c     # folded-weight tile (dominant)
                + 2 * 8 * bn_ * 4             # bias tile (sublane-padded f32)
                + 2 * Mb * bn_ * bytes_o      # out tile
                + Mb * bn_ * 4)               # f32 accumulator scratch

    while _vmem_estimate(bk, bn) > vmem_budget_bytes and bn > 128:
        bn = _round_up(bn // 2, 128)
    while _vmem_estimate(bk, bn) > vmem_budget_bytes and bk > k_align:
        bk = _round_up(bk // 2, k_align)

    CinV_p = _round_up(CinV, bk)
    CoutW_p = _round_up(CoutW, bn)
    grid_m = M_pad // Mb
    grid_n = CoutW_p // bn
    grid_k = CinV_p // bk

    # ---- lane-dense input slab: rows = (n, t), lanes = (c_in, v) ----
    if x_format == "NCTV":
        x2 = x.transpose(0, 2, 1, 3).reshape(M, CinV)
    else:  # "NTCV": no HBM transpose pass needed
        x2 = x.reshape(M, CinV)

    x2 = jnp.pad(x2, ((0, M_pad - M), (0, CinV_p - CinV))).astype(compute_dtype)
    Bp = jnp.pad(B, ((0, CinV_p - CinV), (0, CoutW_p - CoutW))).astype(compute_dtype)
    bias_p = jnp.pad(bias_f, ((0, 0), (0, CoutW_p - CoutW)))   # stays f32

    vmem_limit = max(32 << 20,
                     min(int(_vmem_estimate(bk, bn) * 1.25) + (4 << 20),
                         56 << 20))

    if grid_k == 1:
        kernel = _gcn_kernel
        grid = (grid_m, grid_n)
        in_specs = [
            pl.BlockSpec((Mb, bk), lambda m, n: (m, 0)),
            pl.BlockSpec((bk, bn), lambda m, n: (0, n)),
            pl.BlockSpec((1, bn), lambda m, n: (0, n)),
        ]
        out_spec = pl.BlockSpec((Mb, bn), lambda m, n: (m, n))
        scratch = ()
        dims = ("parallel", "parallel")
    else:
        kernel = _gcn_kernel_ksplit
        grid = (grid_m, grid_n, grid_k)
        in_specs = [
            pl.BlockSpec((Mb, bk), lambda m, n, k: (m, k)),
            pl.BlockSpec((bk, bn), lambda m, n, k: (k, n)),
            pl.BlockSpec((1, bn), lambda m, n, k: (0, n)),
        ]
        out_spec = pl.BlockSpec((Mb, bn), lambda m, n, k: (m, n))
        scratch = (pltpu.VMEM((Mb, bn), jnp.float32),)
        dims = ("parallel", "parallel", "arbitrary")

    out2 = pl.pallas_call(
        kernel,
        out_shape=jax.ShapeDtypeStruct((M_pad, CoutW_p), out_dtype),
        grid_spec=pltpu.PrefetchScalarGridSpec(
            num_scalar_prefetch=0,
            grid=grid,
            in_specs=in_specs,
            out_specs=out_spec,
            scratch_shapes=scratch,
        ),
        compiler_params=pltpu.CompilerParams(
            dimension_semantics=dims,
            vmem_limit_bytes=vmem_limit,
        ),
    )(x2, Bp, bias_p)

    # Unpad and restore the requested layout on the host side.
    out_nt = out2[:M, :CoutW].reshape(N, T, C_out, W)
    if out_format == "NCTV":
        return out_nt.transpose(0, 2, 1, 3)
    elif out_format == "NTCV":
        return out_nt
    else:
        raise ValueError(f"unknown out_format {out_format!r}")


def _reference(x, conv_w, conv_b, A, *, kernel_size):
    # Pure-JAX reference of the PyTorch forward.
    N, C_in, T, V = x.shape
    KC = conv_w.shape[0]
    K = kernel_size
    C_out = KC // K
    y = jnp.einsum('oc,nctv->notv', conv_w, x) + conv_b[None, :, None, None]
    y = y.reshape(N, K, C_out, T, V)
    return jnp.einsum('nkctv,kvw->nctw', y, A)


if __name__ == "__main__":
    # Small shapes consistent with the module (ST-GCN style).
    N, C_in, C_out, K = 2, 4, 8, 3
    T, V = 16, 8            # T temporal frames, V graph nodes; W == V
    key = jax.random.PRNGKey(0)
    kx, kw, kb, ka = jax.random.split(key, 4)

    x = jax.random.normal(kx, (N, C_in, T, V), dtype=jnp.float32)
    # Conv2d(C_in, K*C_out, kernel=(1,1)) weight: (K*C_out, C_in, 1, 1) -> squeezed.
    conv_w = jax.random.normal(kw, (K * C_out, C_in), dtype=jnp.float32) * 0.1
    conv_b = jax.random.normal(kb, (K * C_out,), dtype=jnp.float32) * 0.1
    A = jax.random.normal(ka, (K, V, V), dtype=jnp.float32) * 0.5

    ref = _reference(x, conv_w, conv_b, A, kernel_size=K)

    # f32 operand path: strict parity with the PyTorch forward.
    out_f32 = graph_convolution(x, conv_w, conv_b, A, kernel_size=K,
                                compute_dtype=jnp.float32)
    out_f32 = jax.block_until_ready(out_f32)
    assert out_f32.shape == (N, C_out, T, V), out_f32.shape
    assert jnp.allclose(out_f32, ref, atol=1e-4, rtol=1e-4), \
        float(jnp.max(jnp.abs(out_f32 - ref)))

    # Default path: bf16 operands, f32 MXU accumulation (recommended on
    # v5e/v6e/v7x).  bf16 quantizes the folded operand, hence looser tol.
    out_bf16 = graph_convolution(x, conv_w, conv_b, A, kernel_size=K)
    out_bf16 = jax.block_until_ready(out_bf16)
    assert out_bf16.shape == (N, C_out, T, V), out_bf16.shape
    assert jnp.allclose(out_bf16, ref, atol=5e-2, rtol=5e-2), \
        float(jnp.max(jnp.abs(out_bf16 - ref)))

    # Transpose-free NTCV fast path (keep (N, T, C, V) between ST-GCN layers
    # so the wrapper does no extra HBM transpose passes).
    x_ntcv = x.transpose(0, 2, 1, 3)
    out_ntcv = graph_convolution(x_ntcv, conv_w, conv_b, A, kernel_size=K,
                                 x_format="NTCV", out_format="NTCV")
    out_ntcv = jax.block_until_ready(out_ntcv)
    ref_ntcv = ref.transpose(0, 2, 1, 3)
    assert jnp.allclose(out_ntcv, ref_ntcv, atol=5e-2, rtol=5e-2), \
        float(jnp.max(jnp.abs(out_ntcv - ref_ntcv)))

    print("KERNEL_OK")
</pallas_src>

<mosaic_0001>
module attributes {stable_mosaic.version = 11 : i64} {
  func.func @_gcn_kernel(%arg0: i32, %arg1: i32, %arg2: memref<16x128xf32, #tpu.memory_space<vmem>>, %arg3: memref<128x128xf32, #tpu.memory_space<vmem>>, %arg4: memref<1x128xf32, #tpu.memory_space<vmem>>, %arg5: memref<16x128xf32, #tpu.memory_space<vmem>>) attributes {dimension_semantics = [#tpu.dimension_semantics<parallel>, #tpu.dimension_semantics<parallel>], iteration_bounds = array<i64: 2, 1>, scalar_prefetch = 0 : i64, scratch_operands = 0 : i64, tpu.core_type = #tpu.core_type<tc>, window_params = [{transform_indices = @transform_0, window_bounds = array<i64: 16, 128>}, {transform_indices = @transform_1, window_bounds = array<i64: 128, 128>}, {transform_indices = @transform_2, window_bounds = array<i64: 1, 128>}, {transform_indices = @transform_3, window_bounds = array<i64: 16, 128>}]} {
    %c0 = arith.constant 0 : index
    %c0_0 = arith.constant 0 : index
    %0 = vector.load %arg2[%c0, %c0_0] : memref<16x128xf32, #tpu.memory_space<vmem>>, vector<16x128xf32>
    %c0_1 = arith.constant 0 : index
    %c0_2 = arith.constant 0 : index
    %1 = vector.load %arg3[%c0_1, %c0_2] : memref<128x128xf32, #tpu.memory_space<vmem>>, vector<128x128xf32>
    %cst = arith.constant dense<0.000000e+00> : vector<16x128xf32>
    %2 = tpu.matmul %0, %1, %cst {dimension_numbers = #tpu.dot_dimension_numbers<[1], [0], [0], [1], [0, 0, 1, 1], [], []>} : vector<16x128xf32>, vector<128x128xf32>, vector<16x128xf32> -> vector<16x128xf32>
    %c0_3 = arith.constant 0 : index
    %c0_4 = arith.constant 0 : index
    %3 = vector.load %arg4[%c0_3, %c0_4] : memref<1x128xf32, #tpu.memory_space<vmem>>, vector<1x128xf32>
    %4 = vector.broadcast %3 : vector<1x128xf32> to vector<16x128xf32>
    %5 = arith.addf %2, %4 : vector<16x128xf32>
    %c0_5 = arith.constant 0 : index
    %c0_6 = arith.constant 0 : index
    %6 = vector.load %arg5[%c0_5, %c0_6] : memref<16x128xf32, #tpu.memory_space<vmem>>, vector<16x128xf32>
    tpu.vector_store %arg5[%c0_5, %c0_6], %5 {strides = array<i32>} : memref<16x128xf32, #tpu.memory_space<vmem>>, vector<16x128xf32>,
    return
  }
  func.func @transform_0(%arg0: i32, %arg1: i32) -> (i32, i32) {
    %c0_i32 = arith.constant 0 : i32
    %c0_i32_0 = arith.constant 0 : i32
    return %arg0, %c0_i32 : i32, i32
  }
  func.func @transform_1(%arg0: i32, %arg1: i32) -> (i32, i32) {
    %c0_i32 = arith.constant 0 : i32
    %c0_i32_0 = arith.constant 0 : i32
    return %c0_i32, %arg1 : i32, i32
  }
  func.func @transform_2(%arg0: i32, %arg1: i32) -> (i32, i32) {
    %c0_i32 = arith.constant 0 : i32
    %c0_i32_0 = arith.constant 0 : i32
    return %c0_i32, %arg1 : i32, i32
  }
  func.func @transform_3(%arg0: i32, %arg1: i32) -> (i32, i32) {
    %c0_i32 = arith.constant 0 : i32
    return %arg0, %arg1 : i32, i32
  }
}

</mosaic_0001>

<llo_original>
// kernel: tpu_custom_call.1
$region0: #{tpu_custom_call.1}
  #allocation0 [shape = 'u32[]', space=smem, size = 0x4, offset = 0x4, fixed_abs, tag = 'smem constant byte address 0x4 - core index']
  #allocation1 [shape = 'u32[144,128]{1,0:T(1,128)}', space=vmem, size = 0x12000, scoped, tag = 'internal scratch']
  %s0 = inlined_call_operand.hbm [shape: f32[32,128], index: 0, kind: input, shape index: {}]
  %s1 = inlined_call_operand.hbm [shape: f32[128,128], index: 1, kind: input, shape index: {}]
  %s2 = inlined_call_operand.vmem [shape: f32[1,128], index: 2, kind: input, shape index: {}]
  %s3 = inlined_call_operand.hbm [shape: f32[32,128], index: 3, kind: output, shape index: {}]
  %s4 = sld [smem:[#allocation0]]
  $region53: #{tpu_custom_call.1} parent=0
    _
  %s6 = ssub.s32 1, %s4
  %s7 = scalar_select 0, %s6, %s4
  $region1: #{tpu_custom_call.1} parent=0
    #allocation2 [shape = 'u8[16384]{0}', space=vmem, size = 0x4000, scoped, tag = 'input window, operand 0']
    #allocation3 [shape = 's32[2]{0}', space=sflag, size = 0x8, scoped, tag = 'scoped memory for tpu_custom_call.1']
    #allocation4 [shape = 's32[2]{0}', space=sflag, size = 0x8, scoped, tag = 'scoped memory for tpu_custom_call.1']
    #allocation5 [shape = 'u8[65536]{0}', space=vmem, size = 0x10000, scoped, tag = 'input window, operand 1, single buffered']
    #allocation6 [shape = 's32[1]{0}', space=sflag, size = 0x4, scoped, tag = 'scoped memory for tpu_custom_call.1']
    #allocation7 [shape = 'u8[16384]{0}', space=vmem, size = 0x4000, scoped, tag = 'output window, operand 0']
    %8 = vsyncpa [#allocation3], 0
    %s9 = scalar_lea.sflag [#allocation3], 1
    %10 = vsyncpa %s9, 0
    %11 = vsyncpa [#allocation6], 0
    %12 = vsyncpa [#allocation4], 0
    %s13 = scalar_lea.sflag [#allocation4], 1
    %14 = vsyncpa %s13, 0
    loop: start=0, step=1, limit=4
    $region2: #{tpu_custom_call.1} parent=1 // loop_pre_header
      _
    $region3: #{tpu_custom_call.1} parent=1 // loop_header
      %s16 = sphi 0, %s20
      %p17 = scmp.ge.s32.totalorder %s16, 4
      %s23 = sphi 0, %s35
      %s24 = sphi 0, %s31
      %s25 = sphi 0, %s23
      %s26 = sphi 0, %s24
      %s27 = sphi 0, %s25
      %s28 = sphi 0, %s26
      %s38 = sphi 0, %s40
      %s41 = sphi 0, %s38
      %s42 = sphi 0, %s41
      %s58 = sphi 0, %s42
      %s64 = sphi 0, %s66
      %s67 = sphi 0, %s64
      %s68 = sphi 0, %s67
      %s84 = sphi 0, %s68
      %s90 = sphi 0, %s92
      %s93 = sphi 0, %s90
      %s94 = sphi 0, %s93
      %s110 = sphi 0, %s94
      %s118 = sphi 0, %s120
      %s121 = sphi 0, %s118
      %s122 = sphi 0, %s121
      %s138 = sphi 0, %s122
    $region4: #{tpu_custom_call.1} parent=1 // loop_header_branch
      %19 = sbr.rel (%p17) target = $region8
    $region5: #{tpu_custom_call.1} parent=1 // loop_body
      %s21 = ssub.s32 %s16, 1
      %s22 = ssub.s32 %s16, 2
      %s29 = sadd.s32 1, %s24
      %p30 = scmp.ge.s32.totalorder %s29, 1
      %s31 = scalar_select %p30, 0, %s29
      %s32 = sadd.s32 1, %s23
      %s33 = scalar_select %p30, %s32, %s23
      %p34 = scmp.ge.s32.totalorder %s33, 2
      %s35 = scalar_select %p34, 0, %s33
      %s36 = ssub.s32 %s23, %s35
      %p37 = scmp.eq.s32.totalorder %s36, 0
      %s39 = sadd.s32 %s38, 1
      %s40 = scalar_select %p37, %s38, %s39
      %p43 = pneg %p37
      %p44 = scmp.eq.s32.totalorder %s16, 1
      %p45 = por %p43, %p44
      %p46 = scmp.ne.s32.totalorder %s38, %s41
      %p47 = scmp.eq.s32.totalorder %s16, 0
      %p48 = por %p46, %p47
      %p49 = scmp.ne.s32.totalorder %s38, %s41
      %p50 = scmp.eq.s32.totalorder %s21, 1
      %p51 = por %p49, %p50
      %p52 = scmp.ne.s32.totalorder %s41, %s42
      %p53 = scmp.eq.s32.totalorder %s21, 0
      %p54 = por %p52, %p53
      %p55 = scmp.ne.s32.totalorder %s41, %s42
      %p56 = scmp.eq.s32.totalorder %s22, 1
      %p57 = por %p55, %p56
      %p59 = scmp.ne.s32.totalorder %s42, %s58
      %p60 = scmp.eq.s32.totalorder %s22, 0
      %p61 = por %p59, %p60
      %s62 = ssub.s32 %s24, %s31
      %p63 = scmp.eq.s32.totalorder %s62, 0
      %s65 = sadd.s32 %s64, 1
      %s66 = scalar_select %p63, %s64, %s65
      %p69 = pneg %p63
      %p70 = scmp.eq.s32.totalorder %s16, 1
      %p71 = por %p69, %p70
      %p72 = scmp.ne.s32.totalorder %s64, %s67
      %p73 = scmp.eq.s32.totalorder %s16, 0
      %p74 = por %p72, %p73
      %p75 = scmp.ne.s32.totalorder %s64, %s67
      %p76 = scmp.eq.s32.totalorder %s21, 1
      %p77 = por %p75, %p76
      %p78 = scmp.ne.s32.totalorder %s67, %s68
      %p79 = scmp.eq.s32.totalorder %s21, 0
      %p80 = por %p78, %p79
      %p81 = scmp.ne.s32.totalorder %s67, %s68
      %p82 = scmp.eq.s32.totalorder %s22, 1
      %p83 = por %p81, %p82
      %p85 = scmp.ne.s32.totalorder %s68, %s84
      %p86 = scmp.eq.s32.totalorder %s22, 0
      %p87 = por %p85, %p86
      %s88 = ssub.s32 %s24, %s31
      %p89 = scmp.eq.s32.totalorder %s88, 0
      %s91 = sadd.s32 %s90, 1
      %s92 = scalar_select %p89, %s90, %s91
      %p95 = pneg %p89
      %p96 = scmp.eq.s32.totalorder %s16, 1
      %p97 = por %p95, %p96
      %p98 = scmp.ne.s32.totalorder %s90, %s93
      %p99 = scmp.eq.s32.totalorder %s16, 0
      %p100 = por %p98, %p99
      %p101 = scmp.ne.s32.totalorder %s90, %s93
      %p102 = scmp.eq.s32.totalorder %s21, 1
      %p103 = por %p101, %p102
      %p104 = scmp.ne.s32.totalorder %s93, %s94
      %p105 = scmp.eq.s32.totalorder %s21, 0
      %p106 = por %p104, %p105
      %p107 = scmp.ne.s32.totalorder %s93, %s94
      %p108 = scmp.eq.s32.totalorder %s22, 1
      %p109 = por %p107, %p108
      %p111 = scmp.ne.s32.totalorder %s94, %s110
      %p112 = scmp.eq.s32.totalorder %s22, 0
      %p113 = por %p111, %p112
      %s114 = ssub.s32 %s23, %s35
      %s115 = ssub.s32 %s24, %s31
      %s116 = sor.u32 %s114, %s115
      %p117 = scmp.eq.s32.totalorder %s116, 0
      %s119 = sadd.s32 %s118, 1
      %s120 = scalar_select %p117, %s118, %s119
      %p123 = pneg %p117
      %p124 = scmp.eq.s32.totalorder %s16, 1
      %p125 = por %p123, %p124
      %p126 = scmp.ne.s32.totalorder %s118, %s121
      %p127 = scmp.eq.s32.totalorder %s16, 0
      %p128 = por %p126, %p127
      %p129 = scmp.ne.s32.totalorder %s118, %s121
      %p130 = scmp.eq.s32.totalorder %s21, 1
      %p131 = por %p129, %p130
      %p132 = scmp.ne.s32.totalorder %s121, %s122
      %p133 = scmp.eq.s32.totalorder %s21, 0
      %p134 = por %p132, %p133
      %p135 = scmp.ne.s32.totalorder %s121, %s122
      %p136 = scmp.eq.s32.totalorder %s22, 1
      %p137 = por %p135, %p136
      %p139 = scmp.ne.s32.totalorder %s122, %s138
      %p140 = scmp.eq.s32.totalorder %s22, 0
      %p141 = por %p139, %p140
      %p142 = scmp.le.s32.totalorder 1, %s16
      %p143 = scmp.lt.s32.totalorder %s16, 3
      %p144 = pnand %p142, %p143
      %p145 = pneg %p144
      // Predicated region
      $region9: #{tpu_custom_call.1} parent=5 // pred_check
        _
      $region10: #{tpu_custom_call.1} parent=5 // pred_check_branch
        %147 = sbr.rel (%p144) target = $region12
      $region11: #{tpu_custom_call.1} parent=5 // pred_region
        %s148 = ssub.s32 %s16, 1
        // Predicated region
        $region13: #{tpu_custom_call.1} parent=11 // pred_check
          %p149 = pneg %p80
        $region14: #{tpu_custom_call.1} parent=11 // pred_check_branch
          %151 = sbr.rel (%p149) target = $region16
        $region15: #{tpu_custom_call.1} parent=11 // pred_region
          %s153 = ssub.s32 2048, 2048
          %154 = vsyncadd [#allocation6], %s153
          %s155 = smul.addr %s26, 128
          %s156 = scalar_lea.hbm %s1, %s155
          %s157 = sshll.u32 [#allocation5], 4
          %s158 = int_to_ptr.vmem [resolvable:$true] %s157
          %163 = dma.hbm_to_vmem [thread:$0]  %s156, 2048, %s158, [#allocation6], 128, 128, 8
        $region16: #{tpu_custom_call.1} parent=11 // pred_fallthru
          _
        // Predicated region
        $region17: #{tpu_custom_call.1} parent=11 // pred_check
          %p164 = pneg %p106
        $region18: #{tpu_custom_call.1} parent=11 // pred_check_branch
          %166 = sbr.rel (%p164) target = $region20
        $region19: #{tpu_custom_call.1} parent=11 // pred_region
          %p167 = scmp.lt.s32.totalorder %s26, 0
          %s168 = scalar_select %p167, %s26, 0
          %s169 = scalar_lea.vmem %s2, %s168
        $region20: #{tpu_custom_call.1} parent=11 // pred_fallthru
          _
      $region12: #{tpu_custom_call.1} parent=5 // pred_fallthru
        _
      %p170 = scmp.lt.s32.totalorder %s16, 2
      // Predicated region
      $region21: #{tpu_custom_call.1} parent=5 // pred_check
        %p171 = pneg %p170
      $region22: #{tpu_custom_call.1} parent=5 // pred_check_branch
        %173 = sbr.rel (%p171) target = $region24
      $region23: #{tpu_custom_call.1} parent=5 // pred_region
        // Predicated region
        $region25: #{tpu_custom_call.1} parent=23 // pred_check
          %p174 = pneg %p48
        $region26: #{tpu_custom_call.1} parent=23 // pred_check_branch
          %176 = sbr.rel (%p174) target = $region28
        $region27: #{tpu_custom_call.1} parent=23 // pred_region
          %s177 = sand.u32 %s38, 1
          %s178 = scalar_lea.sflag [#allocation3], %s177
          %s179 = sand.u32 %s38, 1
          %s180 = smul.addr %s179, 16
          %s181 = scalar_lea.vmem [#allocation2], %s180
          %s182 = smul.u32 2, %s23
          %s184 = ssub.s32 256, 256
          %185 = vsyncadd %s178, %s184
          %s186 = smul.addr %s182, 128
          %s187 = scalar_lea.hbm %s0, %s186
          %s188 = sshll.u32 %s181, 4
          %s189 = int_to_ptr.vmem [resolvable:$true] %s188
          %194 = dma.hbm_to_vmem [thread:$0]  %s187, 256, %s189, %s178, 128, 128, 8
        $region28: #{tpu_custom_call.1} parent=23 // pred_fallthru
          _
      $region24: #{tpu_custom_call.1} parent=5 // pred_fallthru
        _
      %p195 = scmp.le.s32.totalorder 1, %s16
      %p196 = scmp.lt.s32.totalorder %s16, 3
      %p197 = pnand %p195, %p196
      %p198 = pneg %p197
      // Predicated region
      $region29: #{tpu_custom_call.1} parent=5 // pred_check
        _
      $region30: #{tpu_custom_call.1} parent=5 // pred_check_branch
        %200 = sbr.rel (%p197) target = $region32
      $region31: #{tpu_custom_call.1} parent=5 // pred_region
        %s201 = ssub.s32 %s16, 1
        %s202 = sand.u32 %s41, 1
        %s203 = scalar_lea.sflag [#allocation3], %s202
        %s204 = sand.u32 %s41, 1
        %s205 = smul.addr %s204, 16
        %s206 = scalar_lea.vmem [#allocation2], %s205
        // Predicated region
        $region33: #{tpu_custom_call.1} parent=31 // pred_check
          %p207 = pneg %p54
        $region34: #{tpu_custom_call.1} parent=31 // pred_check_branch
          %209 = sbr.rel (%p207) target = $region36
        $region35: #{tpu_custom_call.1} parent=31 // pred_region
          %210 = dma.done %s203, 256
        $region36: #{tpu_custom_call.1} parent=31 // pred_fallthru
          _
        // Predicated region
        $region37: #{tpu_custom_call.1} parent=31 // pred_check
          %p211 = pneg %p80
        $region38: #{tpu_custom_call.1} parent=31 // pred_check_branch
          %213 = sbr.rel (%p211) target = $region40
        $region39: #{tpu_custom_call.1} parent=31 // pred_region
          %214 = dma.done [#allocation6], 2048
        $region40: #{tpu_custom_call.1} parent=31 // pred_fallthru
          _
        %s215 = sand.u32 %s41, 1
        %s216 = scalar_lea.sflag [#allocation3], %s215
        %s217 = sand.u32 %s41, 1
        %s218 = smul.addr %s217, 16
        %s219 = scalar_lea.vmem [#allocation2], %s218
        %p220 = pneg %p54
        %p221 = pneg %p51
        %p222 = pneg %p80
        %p223 = pneg %p77
        %p224 = scmp.lt.s32.totalorder %s26, 0
        %s225 = scalar_select %p224, %s26, 0
        %s226 = scalar_lea.vmem %s2, %s225
        %p227 = pneg %p106
        %p228 = pneg %p103
        %p229 = pneg %p134
        %p230 = pneg %p131
        %s231 = sand.u32 %s121, 1
        %s232 = scalar_lea.sflag [#allocation4], %s231
        %s233 = sand.u32 %s121, 1
        %s234 = smul.addr %s233, 16
        %s235 = scalar_lea.vmem [#allocation7], %s234
        %s236 = smul.u32 2, %s25
        %p237 = scmp.lt.s32.totalorder %s26, 0
        %s238 = scalar_select %p237, %s26, 0
        %s239 = scalar_lea.vmem %s2, %s238
        %s240 = smul.u32 2, %s25
        %v241 = vld [vmem:[%s206] sm:$0xff]
        %v242 = vld [vmem:[%s206 + $0x8] sm:$0xff]
        %v243 = vld [vmem:[#allocation5] sm:$0xff]
        %v244 = vld [vmem:[#allocation5 + $0x8] sm:$0xff]
        %v245 = vld [vmem:[#allocation5 + $0x10] sm:$0xff]
        %v246 = vld [vmem:[#allocation5 + $0x18] sm:$0xff]
        %v247 = vld [vmem:[#allocation5 + $0x20] sm:$0xff]
        %v248 = vld [vmem:[#allocation5 + $0x28] sm:$0xff]
        %v249 = vld [vmem:[#allocation5 + $0x30] sm:$0xff]
        %v250 = vld [vmem:[#allocation5 + $0x38] sm:$0xff]
        %v251 = vld [vmem:[#allocation5 + $0x40] sm:$0xff]
        %v252 = vld [vmem:[#allocation5 + $0x48] sm:$0xff]
        %v253 = vld [vmem:[#allocation5 + $0x50] sm:$0xff]
        %v254 = vld [vmem:[#allocation5 + $0x58] sm:$0xff]
        %v255 = vld [vmem:[#allocation5 + $0x60] sm:$0xff]
        %v256 = vld [vmem:[#allocation5 + $0x68] sm:$0xff]
        %v257 = vld [vmem:[#allocation5 + $0x70] sm:$0xff]
        %v258 = vld [vmem:[#allocation5 + $0x78] sm:$0xff]
        %v259 = vld [vmem:[%s239] sm:$0x1]
        %v261 = vlaneseq
        %v262 = vshrl.u32 %v261, 7
        %v263 = vsub.s32 0, %v262
        %v264 = vrot.slane %v259, %v263
        %266 = vmatprep.subr.mxu0 0.0
        %267 = vmatpush1.msra.mxu0 %v258
        %268 = vmatprep.subr.mxu0 0.0
        %269 = vmatpush1.msra.mxu0 %v257
        %270 = vmatprep.subr.mxu0 0.0
        %271 = vmatpush1.msra.mxu0 %v256
        %272 = vmatprep.subr.mxu0 0.0
        %273 = vmatpush1.msra.mxu0 %v255
        %274 = vmatprep.subr.mxu0 0.0
        %275 = vmatpush1.msra.mxu0 %v254
        %276 = vmatprep.subr.mxu0 0.0
        %277 = vmatpush1.msra.mxu0 %v253
        %278 = vmatprep.subr.mxu0 0.0
        %279 = vmatpush1.msra.mxu0 %v252
        %280 = vmatprep.subr.mxu0 0.0
        %281 = vmatpush1.msra.mxu0 %v251
        %282 = vmatprep.subr.mxu0 0.0
        %283 = vmatpush1.msra.mxu0 %v250
        %284 = vmatprep.subr.mxu0 0.0
        %285 = vmatpush1.msra.mxu0 %v249
        %286 = vmatprep.subr.mxu0 0.0
        %287 = vmatpush1.msra.mxu0 %v248
        %288 = vmatprep.subr.mxu0 0.0
        %289 = vmatpush1.msra.mxu0 %v247
        %290 = vmatprep.subr.mxu0 0.0
        %291 = vmatpush1.msra.mxu0 %v246
        %292 = vmatprep.subr.mxu0 0.0
        %293 = vmatpush1.msra.mxu0 %v245
        %294 = vmatprep.subr.mxu0 0.0
        %295 = vmatpush1.msra.mxu0 %v244
        %296 = vmatprep.subr.mxu0 0.0
        %297 = vmatpush1.msra.mxu0 %v243
        %298 = vmatprep.subr.mxu0 0.0
        %299 = vmatpush2.msra.mxu0 0.0
        %300 = vmatprep.subr.mxu0 0.0
        %301 = vmatpush2.msra.mxu0 0.0
        %302 = vmatprep.subr.mxu0 0.0
        %303 = vmatpush2.msra.mxu0 0.0
        %304 = vmatprep.subr.mxu0 0.0
        %305 = vmatpush2.msra.mxu0 0.0
        %306 = vmatprep.subr.mxu0 0.0
        %307 = vmatpush2.msra.mxu0 0.0
        %308 = vmatprep.subr.mxu0 0.0
        %309 = vmatpush2.msra.mxu0 0.0
        %310 = vmatprep.subr.mxu0 0.0
        %311 = vmatpush2.msra.mxu0 0.0
        %312 = vmatprep.subr.mxu0 0.0
        %313 = vmatpush2.msra.mxu0 0.0
        %314 = vmatprep.subr.mxu0 0.0
        %315 = vmatpush2.msra.mxu0 0.0
        %316 = vmatprep.subr.mxu0 0.0
        %317 = vmatpush2.msra.mxu0 0.0
        %318 = vmatprep.subr.mxu0 0.0
        %319 = vmatpush2.msra.mxu0 0.0
        %320 = vmatprep.subr.mxu0 0.0
        %321 = vmatpush2.msra.mxu0 0.0
        %322 = vmatprep.subr.mxu0 0.0
        %323 = vmatpush2.msra.mxu0 0.0
        %324 = vmatprep.subr.mxu0 0.0
        %325 = vmatpush2.msra.mxu0 0.0
        %326 = vmatprep.subr.mxu0 0.0
        %327 = vmatpush2.msra.mxu0 0.0
        %328 = vmatprep.subr.mxu0 0.0
        %329 = vmatpush2.msra.mxu0 0.0
        %330 = vmatprep.mubr.f32.mxu0 0.0
        %331 = vmatmul.mubr.f32.gmra.mxu0 %v241
        %v332 = vpop.f32.mrf.mxu0
        %v333 = vadd.f32 %v264, %v332
        %v334 = vpop.f32.mrf.mxu0
        %335 = vmatprep.mubr.f32.mxu0 0.0
        %336 = vmatmul.mubr.f32.gmra.mxu0 %v242
        %v337 = vpop.f32.mrf.mxu0
        %v338 = vadd.f32 %v264, %v337
        %v339 = vpop.f32.mrf.mxu0
        %340 = vdwg.mxu0
        %341 = vst [vmem:[%s235] sm:$0xff] %v333
        %342 = vst [vmem:[%s235 + $0x8] sm:$0xff] %v338
        %s343 = sand.u32 %s121, 1
        %s344 = scalar_lea.sflag [#allocation4], %s343
        %s345 = sand.u32 %s121, 1
        %s346 = smul.addr %s345, 16
        %s347 = scalar_lea.vmem [#allocation7], %s346
        // Predicated region
        $region41: #{tpu_custom_call.1} parent=31 // pred_check
          %p348 = pneg %p131
        $region42: #{tpu_custom_call.1} parent=31 // pred_check_branch
          %350 = sbr.rel (%p348) target = $region44
        $region43: #{tpu_custom_call.1} parent=31 // pred_region
          %s351 = smul.u32 2, %s25
          %s353 = ssub.s32 256, 256
          %354 = vsyncadd %s344, %s353
          %s355 = sadd.s32 %s26, %s351
          %s356 = smul.addr %s355, 128
          %s357 = scalar_lea.hbm %s3, %s356
          %s358 = sshll.u32 %s347, 4
          %s359 = int_to_ptr.vmem [resolvable:$true] %s358
          %364 = dma.vmem_to_hbm [thread:$0]  %s359, 256, %s357, %s344, 128, 128, 8
        $region44: #{tpu_custom_call.1} parent=31 // pred_fallthru
          _
      $region32: #{tpu_custom_call.1} parent=5 // pred_fallthru
        _
      %p365 = scmp.le.s32.totalorder 2, %s16
      // Predicated region
      $region45: #{tpu_custom_call.1} parent=5 // pred_check
        %p366 = pneg %p365
      $region46: #{tpu_custom_call.1} parent=5 // pred_check_branch
        %368 = sbr.rel (%p366) target = $region48
      $region47: #{tpu_custom_call.1} parent=5 // pred_region
        %s369 = ssub.s32 %s16, 2
        // Predicated region
        $region49: #{tpu_custom_call.1} parent=47 // pred_check
          %p370 = pneg %p137
        $region50: #{tpu_custom_call.1} parent=47 // pred_check_branch
          %372 = sbr.rel (%p370) target = $region52
        $region51: #{tpu_custom_call.1} parent=47 // pred_region
          %s373 = sand.u32 %s122, 1
          %s374 = scalar_lea.sflag [#allocation4], %s373
          %s375 = sand.u32 %s122, 1
          %s376 = smul.addr %s375, 16
          %s377 = scalar_lea.vmem [#allocation7], %s376
          %378 = dma.done %s374, 256
        $region52: #{tpu_custom_call.1} parent=47 // pred_fallthru
          _
      $region48: #{tpu_custom_call.1} parent=5 // pred_fallthru
        _
    $region6: #{tpu_custom_call.1} parent=1 // loop_footer
      %s20 = sadd.s32 1, %s16
    $region7: #{tpu_custom_call.1} parent=1 // loop_footer_branch
      %15 = sbr.rel target = $region3
    $region8: #{tpu_custom_call.1} parent=1 // loop_exit
      _
    %379 = vsyncpa [#allocation3], 1
    %s380 = scalar_lea.sflag [#allocation3], 1
    %381 = vsyncpa %s380, 1
    %382 = vsyncpa [#allocation6], 1
    %383 = vsyncpa [#allocation4], 1
    %s384 = scalar_lea.sflag [#allocation4], 1
    %385 = vsyncpa %s384, 1

</llo_original>
